<compile_context>
chip_gen: v7x
topology: tpu7x:2x2x1
jax: 0.10.0
libtpu: 0.0.40
codegen_flags: <defaults>
</compile_context>

<pallas_src>
import functools

import jax
import jax.numpy as jnp
from jax.experimental import pallas as pl
from jax.experimental.pallas import tpu as pltpu

LANE = 128            # lane width: pad all feature dims to a multiple of this
SUBLANE = 8           # sublane granularity for the batch tile
DEFAULT_TILE_B = 256  # MXU-sized batch tile (full 256x256 pass on v6e/v7x)


def _round_up(n, m):
    return ((n + m - 1) // m) * m


def autoencoder_kernel(x_ref,
                       w1_ref, b1_ref,   # Linear(in  -> h)
                       w2_ref, b2_ref,   # Linear(h   -> h/2)
                       w3_ref, b3_ref,   # Linear(h/2 -> h)
                       w4_ref, b4_ref,   # Linear(h   -> in)
                       enc_ref, dec_ref):
    x = x_ref[...]                              # bf16 activation tile

    # --- encoder ---
    h1 = jnp.dot(x, w1_ref[...], preferred_element_type=jnp.float32) + b1_ref[...]
    h1 = jnp.maximum(h1, 0.0)
    enc = jnp.dot(h1.astype(jnp.bfloat16), w2_ref[...],
                  preferred_element_type=jnp.float32) + b2_ref[...]
    enc = jnp.maximum(enc, 0.0)

    # --- decoder ---
    h3 = jnp.dot(enc.astype(jnp.bfloat16), w3_ref[...],
                 preferred_element_type=jnp.float32) + b3_ref[...]
    h3 = jnp.maximum(h3, 0.0)
    dec = jnp.dot(h3.astype(jnp.bfloat16), w4_ref[...],
                  preferred_element_type=jnp.float32) + b4_ref[...]
    # Final decoder layer has no activation (matches the PyTorch module).

    enc_ref[...] = enc.astype(enc_ref.dtype)
    dec_ref[...] = dec.astype(dec_ref.dtype)


def _pad2(a, rows, cols, dtype):
    a = a.astype(dtype)
    return jnp.pad(a, ((0, rows - a.shape[0]), (0, cols - a.shape[1])))


@functools.partial(jax.jit, static_argnames=("tile_b",))
def autoencoder_forward(x, params, *, tile_b=DEFAULT_TILE_B):
    """x: (B, input_dim) float32. params: dict from init_params. Returns (enc, dec)."""
    B, input_dim = x.shape
    hidden_dim = params["w1"].shape[1]
    half_dim = hidden_dim // 2

    # Lane-dense padded feature dims (zero padding is exact for Linear+ReLU).
    p_in = _round_up(input_dim, LANE)
    p_h = _round_up(hidden_dim, LANE)
    p_half = _round_up(half_dim, LANE)

    # Batch tile: full MXU pass when B is large, shrink (sublane-aligned) when tiny.
    tb = min(tile_b, _round_up(B, SUBLANE))
    pB = _round_up(B, tb)
    grid = (pB // tb,)

    # Activations in bf16 (halves input DMA traffic; matmuls are bf16 anyway).
    xp = _pad2(x, pB, p_in, jnp.bfloat16)
    w1 = _pad2(params["w1"], p_in, p_h, jnp.bfloat16)
    b1 = _pad2(params["b1"], 1, p_h, jnp.float32)
    w2 = _pad2(params["w2"], p_h, p_half, jnp.bfloat16)
    b2 = _pad2(params["b2"], 1, p_half, jnp.float32)
    w3 = _pad2(params["w3"], p_half, p_h, jnp.bfloat16)
    b3 = _pad2(params["b3"], 1, p_h, jnp.float32)
    w4 = _pad2(params["w4"], p_h, p_in, jnp.bfloat16)
    b4 = _pad2(params["b4"], 1, p_in, jnp.float32)

    def stream(shape):      # activations: new batch tile each grid step
        return pl.BlockSpec(shape, lambda i: (i, 0))

    def resident(shape):    # weights/biases: same block every step -> stay in VMEM
        return pl.BlockSpec(shape, lambda i: (0, 0))

    flops = 2 * pB * (p_in * p_h + p_h * p_half + p_half * p_h + p_h * p_in)
    bytes_accessed = (
        xp.size * 2                                              # bf16 input
        + (w1.size + w2.size + w3.size + w4.size) * 2            # bf16 weights
        + (b1.size + b2.size + b3.size + b4.size) * 4            # f32 biases
        + pB * p_half * 4 + pB * p_in * 4                        # enc + dec outputs
    )

    enc_p, dec_p = pl.pallas_call(
        autoencoder_kernel,
        out_shape=(
            jax.ShapeDtypeStruct((pB, p_half), jnp.float32),
            jax.ShapeDtypeStruct((pB, p_in), jnp.float32),
        ),
        grid=grid,
        in_specs=[
            stream((tb, p_in)),                                  # x
            resident((p_in, p_h)), resident((1, p_h)),           # w1, b1
            resident((p_h, p_half)), resident((1, p_half)),      # w2, b2
            resident((p_half, p_h)), resident((1, p_h)),         # w3, b3
            resident((p_h, p_in)), resident((1, p_in)),          # w4, b4
        ],
        out_specs=(
            stream((tb, p_half)),                                # enc
            stream((tb, p_in)),                                  # dec
        ),
        compiler_params=pltpu.CompilerParams(
            dimension_semantics=("parallel",),        # megacore-shard batch on v7x
            vmem_limit_bytes=64 * 1024 * 1024,        # explicit budget (v7x-safe)
        ),
        cost_estimate=pl.CostEstimate(
            flops=flops, transcendentals=0, bytes_accessed=bytes_accessed),
    )(xp, w1, b1, w2, b2, w3, b3, w4, b4)

    # Slice the valid (un-padded) region back out.
    return enc_p[:B, :half_dim], dec_p[:B, :input_dim]


def init_params(key, input_dim, hidden_dim):
    """Deterministic PyTorch-style init. Weights stored as (in_features, out_features)."""
    half_dim = hidden_dim // 2
    keys = jax.random.split(key, 8)

    def linear(kw, kb, fan_in, fan_out):
        bound = 1.0 / jnp.sqrt(jnp.asarray(fan_in, jnp.float32))
        w = jax.random.uniform(kw, (fan_in, fan_out), jnp.float32, -bound, bound)
        b = jax.random.uniform(kb, (1, fan_out), jnp.float32, -bound, bound)
        return w, b

    w1, b1 = linear(keys[0], keys[1], input_dim, hidden_dim)
    w2, b2 = linear(keys[2], keys[3], hidden_dim, half_dim)
    w3, b3 = linear(keys[4], keys[5], half_dim, hidden_dim)
    w4, b4 = linear(keys[6], keys[7], hidden_dim, input_dim)
    return {"w1": w1, "b1": b1, "w2": w2, "b2": b2,
            "w3": w3, "b3": b3, "w4": w4, "b4": b4}


def autoencoder_ref(x, p):
    """Pure-JAX reference mirroring the kernel's bf16-matmul / f32-accumulate path."""
    def mm(a, w):
        return jnp.dot(a.astype(jnp.bfloat16), w.astype(jnp.bfloat16),
                       preferred_element_type=jnp.float32)
    h1 = jnp.maximum(mm(x, p["w1"]) + p["b1"], 0.0)
    enc = jnp.maximum(mm(h1, p["w2"]) + p["b2"], 0.0)
    h3 = jnp.maximum(mm(enc, p["w3"]) + p["b3"], 0.0)
    dec = mm(h3, p["w4"]) + p["b4"]
    return enc, dec


if __name__ == "__main__":
    B, input_dim, hidden_dim = 8, 32, 32

    key = jax.random.PRNGKey(0)
    k_x, k_p = jax.random.split(key)
    x = jax.random.normal(k_x, (B, input_dim), jnp.float32)
    params = init_params(k_p, input_dim, hidden_dim)

    enc, dec = autoencoder_forward(x, params)
    jax.block_until_ready((enc, dec))

    enc_ref, dec_ref = autoencoder_ref(x, params)
    assert enc.shape == (B, hidden_dim // 2) and dec.shape == (B, input_dim)
    assert jnp.allclose(enc, enc_ref, atol=1e-2, rtol=1e-2)
    assert jnp.allclose(dec, dec_ref, atol=1e-2, rtol=1e-2)

    print("KERNEL_OK")
</pallas_src>

<mosaic_0001>
module attributes {stable_mosaic.version = 11 : i64} {
  func.func @autoencoder_kernel(%arg0: i32, %arg1: memref<8x128xbf16, #tpu.memory_space<vmem>>, %arg2: memref<128x128xbf16, #tpu.memory_space<vmem>>, %arg3: memref<1x128xf32, #tpu.memory_space<vmem>>, %arg4: memref<128x128xbf16, #tpu.memory_space<vmem>>, %arg5: memref<1x128xf32, #tpu.memory_space<vmem>>, %arg6: memref<128x128xbf16, #tpu.memory_space<vmem>>, %arg7: memref<1x128xf32, #tpu.memory_space<vmem>>, %arg8: memref<128x128xbf16, #tpu.memory_space<vmem>>, %arg9: memref<1x128xf32, #tpu.memory_space<vmem>>, %arg10: memref<8x128xf32, #tpu.memory_space<vmem>>, %arg11: memref<8x128xf32, #tpu.memory_space<vmem>>) attributes {dimension_semantics = [#tpu.dimension_semantics<parallel>], iteration_bounds = array<i64: 1>, scalar_prefetch = 0 : i64, scratch_operands = 0 : i64, tpu.core_type = #tpu.core_type<tc>, window_params = [{transform_indices = @transform_0, window_bounds = array<i64: 8, 128>}, {pipeline_mode = #tpu.pipeline_mode<synchronous>, transform_indices = @transform_1, window_bounds = array<i64: 128, 128>}, {pipeline_mode = #tpu.pipeline_mode<synchronous>, transform_indices = @transform_2, window_bounds = array<i64: 1, 128>}, {pipeline_mode = #tpu.pipeline_mode<synchronous>, transform_indices = @transform_3, window_bounds = array<i64: 128, 128>}, {pipeline_mode = #tpu.pipeline_mode<synchronous>, transform_indices = @transform_4, window_bounds = array<i64: 1, 128>}, {pipeline_mode = #tpu.pipeline_mode<synchronous>, transform_indices = @transform_5, window_bounds = array<i64: 128, 128>}, {pipeline_mode = #tpu.pipeline_mode<synchronous>, transform_indices = @transform_6, window_bounds = array<i64: 1, 128>}, {pipeline_mode = #tpu.pipeline_mode<synchronous>, transform_indices = @transform_7, window_bounds = array<i64: 128, 128>}, {pipeline_mode = #tpu.pipeline_mode<synchronous>, transform_indices = @transform_8, window_bounds = array<i64: 1, 128>}, {transform_indices = @transform_9, window_bounds = array<i64: 8, 128>}, {transform_indices = @transform_10, window_bounds = array<i64: 8, 128>}]} {
    %c0 = arith.constant 0 : index
    %c0_0 = arith.constant 0 : index
    %0 = vector.load %arg1[%c0, %c0_0] : memref<8x128xbf16, #tpu.memory_space<vmem>>, vector<8x128xbf16>
    %c0_1 = arith.constant 0 : index
    %c0_2 = arith.constant 0 : index
    %1 = vector.load %arg2[%c0_1, %c0_2] : memref<128x128xbf16, #tpu.memory_space<vmem>>, vector<128x128xbf16>
    %cst = arith.constant dense<0.000000e+00> : vector<8x128xf32>
    %2 = tpu.matmul %0, %1, %cst {dimension_numbers = #tpu.dot_dimension_numbers<[1], [0], [0], [1], [0, 0, 1, 1], [], []>} : vector<8x128xbf16>, vector<128x128xbf16>, vector<8x128xf32> -> vector<8x128xf32>
    %c0_3 = arith.constant 0 : index
    %c0_4 = arith.constant 0 : index
    %3 = vector.load %arg3[%c0_3, %c0_4] : memref<1x128xf32, #tpu.memory_space<vmem>>, vector<1x128xf32>
    %4 = vector.broadcast %3 : vector<1x128xf32> to vector<8x128xf32>
    %5 = arith.addf %2, %4 : vector<8x128xf32>
    %cst_5 = arith.constant 0.000000e+00 : f32
    %6 = vector.broadcast %cst_5 : f32 to vector<8x128xf32>
    %7 = arith.maximumf %5, %6 : vector<8x128xf32>
    %8 = arith.truncf %7 : vector<8x128xf32> to vector<8x128xbf16>
    %c0_6 = arith.constant 0 : index
    %c0_7 = arith.constant 0 : index
    %9 = vector.load %arg4[%c0_6, %c0_7] : memref<128x128xbf16, #tpu.memory_space<vmem>>, vector<128x128xbf16>
    %cst_8 = arith.constant dense<0.000000e+00> : vector<8x128xf32>
    %10 = tpu.matmul %8, %9, %cst_8 {dimension_numbers = #tpu.dot_dimension_numbers<[1], [0], [0], [1], [0, 0, 1, 1], [], []>} : vector<8x128xbf16>, vector<128x128xbf16>, vector<8x128xf32> -> vector<8x128xf32>
    %c0_9 = arith.constant 0 : index
    %c0_10 = arith.constant 0 : index
    %11 = vector.load %arg5[%c0_9, %c0_10] : memref<1x128xf32, #tpu.memory_space<vmem>>, vector<1x128xf32>
    %12 = vector.broadcast %11 : vector<1x128xf32> to vector<8x128xf32>
    %13 = arith.addf %10, %12 : vector<8x128xf32>
    %cst_11 = arith.constant 0.000000e+00 : f32
    %14 = vector.broadcast %cst_11 : f32 to vector<8x128xf32>
    %15 = arith.maximumf %13, %14 : vector<8x128xf32>
    %16 = arith.truncf %15 : vector<8x128xf32> to vector<8x128xbf16>
    %c0_12 = arith.constant 0 : index
    %c0_13 = arith.constant 0 : index
    %17 = vector.load %arg6[%c0_12, %c0_13] : memref<128x128xbf16, #tpu.memory_space<vmem>>, vector<128x128xbf16>
    %cst_14 = arith.constant dense<0.000000e+00> : vector<8x128xf32>
    %18 = tpu.matmul %16, %17, %cst_14 {dimension_numbers = #tpu.dot_dimension_numbers<[1], [0], [0], [1], [0, 0, 1, 1], [], []>} : vector<8x128xbf16>, vector<128x128xbf16>, vector<8x128xf32> -> vector<8x128xf32>
    %c0_15 = arith.constant 0 : index
    %c0_16 = arith.constant 0 : index
    %19 = vector.load %arg7[%c0_15, %c0_16] : memref<1x128xf32, #tpu.memory_space<vmem>>, vector<1x128xf32>
    %20 = vector.broadcast %19 : vector<1x128xf32> to vector<8x128xf32>
    %21 = arith.addf %18, %20 : vector<8x128xf32>
    %cst_17 = arith.constant 0.000000e+00 : f32
    %22 = vector.broadcast %cst_17 : f32 to vector<8x128xf32>
    %23 = arith.maximumf %21, %22 : vector<8x128xf32>
    %24 = arith.truncf %23 : vector<8x128xf32> to vector<8x128xbf16>
    %c0_18 = arith.constant 0 : index
    %c0_19 = arith.constant 0 : index
    %25 = vector.load %arg8[%c0_18, %c0_19] : memref<128x128xbf16, #tpu.memory_space<vmem>>, vector<128x128xbf16>
    %cst_20 = arith.constant dense<0.000000e+00> : vector<8x128xf32>
    %26 = tpu.matmul %24, %25, %cst_20 {dimension_numbers = #tpu.dot_dimension_numbers<[1], [0], [0], [1], [0, 0, 1, 1], [], []>} : vector<8x128xbf16>, vector<128x128xbf16>, vector<8x128xf32> -> vector<8x128xf32>
    %c0_21 = arith.constant 0 : index
    %c0_22 = arith.constant 0 : index
    %27 = vector.load %arg9[%c0_21, %c0_22] : memref<1x128xf32, #tpu.memory_space<vmem>>, vector<1x128xf32>
    %28 = vector.broadcast %27 : vector<1x128xf32> to vector<8x128xf32>
    %29 = arith.addf %26, %28 : vector<8x128xf32>
    %c0_23 = arith.constant 0 : index
    %c0_24 = arith.constant 0 : index
    %30 = vector.load %arg10[%c0_23, %c0_24] : memref<8x128xf32, #tpu.memory_space<vmem>>, vector<8x128xf32>
    tpu.vector_store %arg10[%c0_23, %c0_24], %15 {strides = array<i32>} : memref<8x128xf32, #tpu.memory_space<vmem>>, vector<8x128xf32>,
    %c0_25 = arith.constant 0 : index
    %c0_26 = arith.constant 0 : index
    %31 = vector.load %arg11[%c0_25, %c0_26] : memref<8x128xf32, #tpu.memory_space<vmem>>, vector<8x128xf32>
    tpu.vector_store %arg11[%c0_25, %c0_26], %29 {strides = array<i32>} : memref<8x128xf32, #tpu.memory_space<vmem>>, vector<8x128xf32>,
    return
  }
  func.func @transform_0(%arg0: i32) -> (i32, i32) {
    %c0_i32 = arith.constant 0 : i32
    %c0_i32_0 = arith.constant 0 : i32
    return %arg0, %c0_i32 : i32, i32
  }
  func.func @transform_1(%arg0: i32) -> (i32, i32) {
    %c0_i32 = arith.constant 0 : i32
    %c0_i32_0 = arith.constant 0 : i32
    %c0_i32_1 = arith.constant 0 : i32
    return %c0_i32, %c0_i32_0 : i32, i32
  }
  func.func @transform_2(%arg0: i32) -> (i32, i32) {
    %c0_i32 = arith.constant 0 : i32
    %c0_i32_0 = arith.constant 0 : i32
    %c0_i32_1 = arith.constant 0 : i32
    return %c0_i32, %c0_i32_0 : i32, i32
  }
  func.func @transform_3(%arg0: i32) -> (i32, i32) {
    %c0_i32 = arith.constant 0 : i32
    %c0_i32_0 = arith.constant 0 : i32
    %c0_i32_1 = arith.constant 0 : i32
    return %c0_i32, %c0_i32_0 : i32, i32
  }
  func.func @transform_4(%arg0: i32) -> (i32, i32) {
    %c0_i32 = arith.constant 0 : i32
    %c0_i32_0 = arith.constant 0 : i32
    %c0_i32_1 = arith.constant 0 : i32
    return %c0_i32, %c0_i32_0 : i32, i32
  }
  func.func @transform_5(%arg0: i32) -> (i32, i32) {
    %c0_i32 = arith.constant 0 : i32
    %c0_i32_0 = arith.constant 0 : i32
    %c0_i32_1 = arith.constant 0 : i32
    return %c0_i32, %c0_i32_0 : i32, i32
  }
  func.func @transform_6(%arg0: i32) -> (i32, i32) {
    %c0_i32 = arith.constant 0 : i32
    %c0_i32_0 = arith.constant 0 : i32
    %c0_i32_1 = arith.constant 0 : i32
    return %c0_i32, %c0_i32_0 : i32, i32
  }
  func.func @transform_7(%arg0: i32) -> (i32, i32) {
    %c0_i32 = arith.constant 0 : i32
    %c0_i32_0 = arith.constant 0 : i32
    %c0_i32_1 = arith.constant 0 : i32
    return %c0_i32, %c0_i32_0 : i32, i32
  }
  func.func @transform_8(%arg0: i32) -> (i32, i32) {
    %c0_i32 = arith.constant 0 : i32
    %c0_i32_0 = arith.constant 0 : i32
    %c0_i32_1 = arith.constant 0 : i32
    return %c0_i32, %c0_i32_0 : i32, i32
  }
  func.func @transform_9(%arg0: i32) -> (i32, i32) {
    %c0_i32 = arith.constant 0 : i32
    %c0_i32_0 = arith.constant 0 : i32
    return %arg0, %c0_i32 : i32, i32
  }
  func.func @transform_10(%arg0: i32) -> (i32, i32) {
    %c0_i32 = arith.constant 0 : i32
    %c0_i32_0 = arith.constant 0 : i32
    return %arg0, %c0_i32 : i32, i32
  }
}

</mosaic_0001>

<llo_original>
// kernel: autoencoder_forward.1
$region0: #{autoencoder_forward.1}
  #allocation0 [shape = 'u32[]', space=smem, size = 0x4, offset = 0x4, fixed_abs, tag = 'smem constant byte address 0x4 - core index']
  #allocation1 [shape = 'u32[144,128]{1,0:T(1,128)}', space=vmem, size = 0x12000, scoped, tag = 'internal scratch']
  %s0 = inlined_call_operand.hbm [shape: bf16[8,128], index: 0, kind: input, shape index: {}]
  %s1 = inlined_call_operand.hbm [shape: bf16[128,128], index: 1, kind: input, shape index: {}]
  %s2 = inlined_call_operand.hbm [shape: f32[1,128], index: 2, kind: input, shape index: {}]
  %s3 = inlined_call_operand.hbm [shape: bf16[128,128], index: 3, kind: input, shape index: {}]
  %s4 = inlined_call_operand.hbm [shape: f32[1,128], index: 4, kind: input, shape index: {}]
  %s5 = inlined_call_operand.hbm [shape: bf16[128,128], index: 5, kind: input, shape index: {}]
  %s6 = inlined_call_operand.hbm [shape: f32[1,128], index: 6, kind: input, shape index: {}]
  %s7 = inlined_call_operand.hbm [shape: bf16[128,128], index: 7, kind: input, shape index: {}]
  %s8 = inlined_call_operand.hbm [shape: f32[1,128], index: 8, kind: input, shape index: {}]
  %s9 = inlined_call_operand.hbm [shape: f32[8,128], index: 9, kind: output, shape index: {0}]
  %s10 = inlined_call_operand.hbm [shape: f32[8,128], index: 10, kind: output, shape index: {1}]
  %11 = xla_tuple %s9, %s10
  %s12 = sld [smem:[#allocation0]]
  $region90: #{autoencoder_forward.1} parent=0
    _
  %s14 = ssub.s32 1, %s12
  %s15 = scalar_select 0, %s14, %s12
  $region1: #{autoencoder_forward.1} parent=0
    #allocation2 [shape = 'u8[2048]{0}', space=vmem, size = 0x800, scoped, tag = 'input window, operand 0, single buffered']
    #allocation3 [shape = 's32[1]{0}', space=sflag, size = 0x4, scoped, tag = 'scoped memory for autoencoder_forward.1']
    #allocation4 [shape = 's32[1]{0}', space=sflag, size = 0x4, scoped, tag = 'scoped memory for autoencoder_forward.1']
    #allocation5 [shape = 'u8[32768]{0}', space=vmem, size = 0x8000, scoped, tag = 'input window, operand 1, single buffered']
    #allocation6 [shape = 's32[1]{0}', space=sflag, size = 0x4, scoped, tag = 'scoped memory for autoencoder_forward.1']
    #allocation7 [shape = 'u8[512]{0}', space=vmem, size = 0x400, scoped, tag = 'input window, operand 2, single buffered']
    #allocation8 [shape = 'u8[32768]{0}', space=vmem, size = 0x8000, scoped, tag = 'input window, operand 3, single buffered']
    #allocation9 [shape = 's32[1]{0}', space=sflag, size = 0x4, scoped, tag = 'scoped memory for autoencoder_forward.1']
    #allocation10 [shape = 'u8[512]{0}', space=vmem, size = 0x400, scoped, tag = 'input window, operand 4, single buffered']
    #allocation11 [shape = 'u8[32768]{0}', space=vmem, size = 0x8000, scoped, tag = 'input window, operand 5, single buffered']
    #allocation12 [shape = 's32[1]{0}', space=sflag, size = 0x4, scoped, tag = 'scoped memory for autoencoder_forward.1']
    #allocation13 [shape = 'u8[512]{0}', space=vmem, size = 0x400, scoped, tag = 'input window, operand 6, single buffered']
    #allocation14 [shape = 'u8[32768]{0}', space=vmem, size = 0x8000, scoped, tag = 'input window, operand 7, single buffered']
    #allocation15 [shape = 's32[1]{0}', space=sflag, size = 0x4, scoped, tag = 'scoped memory for autoencoder_forward.1']
    #allocation16 [shape = 'u8[512]{0}', space=vmem, size = 0x400, scoped, tag = 'input window, operand 8, single buffered']
    #allocation17 [shape = 'u8[4096]{0}', space=vmem, size = 0x1000, scoped, tag = 'output window, operand 0, single buffered']
    #allocation18 [shape = 'u8[4096]{0}', space=vmem, size = 0x1000, scoped, tag = 'output window, operand 1, single buffered']
    #allocation19 [shape = 's32[1]{0}', space=sflag, size = 0x4, scoped, tag = 'scoped memory for autoencoder_forward.1']
    %16 = vsyncpa [#allocation3], 0
    %17 = vsyncpa [#allocation6], 0
    %18 = vsyncpa [#allocation9], 0
    %19 = vsyncpa [#allocation12], 0
    %20 = vsyncpa [#allocation15], 0
    %21 = vsyncpa [#allocation4], 0
    %22 = vsyncpa [#allocation19], 0
    // Predicated region
    $region2: #{autoencoder_forward.1} parent=1 // pred_check
      _
    $region3: #{autoencoder_forward.1} parent=1 // pred_check_branch
      %24 = sbr.rel (0) target = $region5
    $region4: #{autoencoder_forward.1} parent=1 // pred_region
      %s26 = ssub.s32 64, 64
      %27 = vsyncadd [#allocation3], %s26
      %s29 = sshll.u32 [#allocation2], 4
      %s30 = int_to_ptr.vmem [resolvable:$true] %s29
      %32 = dma.hbm_to_vmem [thread:$0]  %s0, 64, %s30, [#allocation3]
    $region5: #{autoencoder_forward.1} parent=1 // pred_fallthru
      _
    // Predicated region
    $region6: #{autoencoder_forward.1} parent=1 // pred_check
      _
    $region7: #{autoencoder_forward.1} parent=1 // pred_check_branch
      %34 = sbr.rel (0) target = $region9
    $region8: #{autoencoder_forward.1} parent=1 // pred_region
      %s36 = ssub.s32 1024, 1024
      %37 = vsyncadd [#allocation6], %s36
      %s38 = sshll.u32 [#allocation5], 4
      %s39 = int_to_ptr.vmem [resolvable:$true] %s38
      %44 = dma.hbm_to_vmem [thread:$0]  %s1, 1024, %s39, [#allocation6], 64, 64, 4
    $region9: #{autoencoder_forward.1} parent=1 // pred_fallthru
      _
    // Predicated region
    $region10: #{autoencoder_forward.1} parent=1 // pred_check
      _
    $region11: #{autoencoder_forward.1} parent=1 // pred_check_branch
      %46 = sbr.rel (0) target = $region13
    $region12: #{autoencoder_forward.1} parent=1 // pred_region
      %s48 = ssub.s32 16, 16
      %49 = vsyncadd [#allocation6], %s48
      %s51 = sshll.u32 [#allocation7], 4
      %s52 = int_to_ptr.vmem [resolvable:$true] %s51
      %54 = dma.hbm_to_vmem [thread:$0]  %s2, 16, %s52, [#allocation6]
    $region13: #{autoencoder_forward.1} parent=1 // pred_fallthru
      _
    // Predicated region
    $region14: #{autoencoder_forward.1} parent=1 // pred_check
      _
    $region15: #{autoencoder_forward.1} parent=1 // pred_check_branch
      %56 = sbr.rel (0) target = $region17
    $region16: #{autoencoder_forward.1} parent=1 // pred_region
      %s58 = ssub.s32 1024, 1024
      %59 = vsyncadd [#allocation9], %s58
      %s60 = sshll.u32 [#allocation8], 4
      %s61 = int_to_ptr.vmem [resolvable:$true] %s60
      %66 = dma.hbm_to_vmem [thread:$0]  %s3, 1024, %s61, [#allocation9], 64, 64, 4
    $region17: #{autoencoder_forward.1} parent=1 // pred_fallthru
      _
    // Predicated region
    $region18: #{autoencoder_forward.1} parent=1 // pred_check
      _
    $region19: #{autoencoder_forward.1} parent=1 // pred_check_branch
      %68 = sbr.rel (0) target = $region21
    $region20: #{autoencoder_forward.1} parent=1 // pred_region
      %s70 = ssub.s32 16, 16
      %71 = vsyncadd [#allocation9], %s70
      %s73 = sshll.u32 [#allocation10], 4
      %s74 = int_to_ptr.vmem [resolvable:$true] %s73
      %76 = dma.hbm_to_vmem [thread:$0]  %s4, 16, %s74, [#allocation9]
    $region21: #{autoencoder_forward.1} parent=1 // pred_fallthru
      _
    // Predicated region
    $region22: #{autoencoder_forward.1} parent=1 // pred_check
      _
    $region23: #{autoencoder_forward.1} parent=1 // pred_check_branch
      %78 = sbr.rel (0) target = $region25
    $region24: #{autoencoder_forward.1} parent=1 // pred_region
      %s80 = ssub.s32 1024, 1024
      %81 = vsyncadd [#allocation12], %s80
      %s82 = sshll.u32 [#allocation11], 4
      %s83 = int_to_ptr.vmem [resolvable:$true] %s82
      %88 = dma.hbm_to_vmem [thread:$0]  %s5, 1024, %s83, [#allocation12], 64, 64, 4
    $region25: #{autoencoder_forward.1} parent=1 // pred_fallthru
      _
    // Predicated region
    $region26: #{autoencoder_forward.1} parent=1 // pred_check
      _
    $region27: #{autoencoder_forward.1} parent=1 // pred_check_branch
      %90 = sbr.rel (0) target = $region29
    $region28: #{autoencoder_forward.1} parent=1 // pred_region
      %s92 = ssub.s32 16, 16
      %93 = vsyncadd [#allocation12], %s92
      %s95 = sshll.u32 [#allocation13], 4
      %s96 = int_to_ptr.vmem [resolvable:$true] %s95
      %98 = dma.hbm_to_vmem [thread:$0]  %s6, 16, %s96, [#allocation12]
    $region29: #{autoencoder_forward.1} parent=1 // pred_fallthru
      _
    // Predicated region
    $region30: #{autoencoder_forward.1} parent=1 // pred_check
      _
    $region31: #{autoencoder_forward.1} parent=1 // pred_check_branch
      %100 = sbr.rel (0) target = $region33
    $region32: #{autoencoder_forward.1} parent=1 // pred_region
      %s102 = ssub.s32 1024, 1024
      %103 = vsyncadd [#allocation15], %s102
      %s104 = sshll.u32 [#allocation14], 4
      %s105 = int_to_ptr.vmem [resolvable:$true] %s104
      %110 = dma.hbm_to_vmem [thread:$0]  %s7, 1024, %s105, [#allocation15], 64, 64, 4
    $region33: #{autoencoder_forward.1} parent=1 // pred_fallthru
      _
    // Predicated region
    $region34: #{autoencoder_forward.1} parent=1 // pred_check
      _
    $region35: #{autoencoder_forward.1} parent=1 // pred_check_branch
      %112 = sbr.rel (0) target = $region37
    $region36: #{autoencoder_forward.1} parent=1 // pred_region
      %s114 = ssub.s32 16, 16
      %115 = vsyncadd [#allocation15], %s114
      %s117 = sshll.u32 [#allocation16], 4
      %s118 = int_to_ptr.vmem [resolvable:$true] %s117
      %120 = dma.hbm_to_vmem [thread:$0]  %s8, 16, %s118, [#allocation15]
    $region37: #{autoencoder_forward.1} parent=1 // pred_fallthru
      _
    // Predicated region
    $region38: #{autoencoder_forward.1} parent=1 // pred_check
      _
    $region39: #{autoencoder_forward.1} parent=1 // pred_check_branch
      %122 = sbr.rel (0) target = $region41
    $region40: #{autoencoder_forward.1} parent=1 // pred_region
      %123 = dma.done [#allocation3], 64
    $region41: #{autoencoder_forward.1} parent=1 // pred_fallthru
      _
    // Predicated region
    $region42: #{autoencoder_forward.1} parent=1 // pred_check
      _
    $region43: #{autoencoder_forward.1} parent=1 // pred_check_branch
      %125 = sbr.rel (0) target = $region45
    $region44: #{autoencoder_forward.1} parent=1 // pred_region
      %126 = dma.done [#allocation6], 1024
    $region45: #{autoencoder_forward.1} parent=1 // pred_fallthru
      _
    // Predicated region
    $region46: #{autoencoder_forward.1} parent=1 // pred_check
      _
    $region47: #{autoencoder_forward.1} parent=1 // pred_check_branch
      %128 = sbr.rel (0) target = $region49
    $region48: #{autoencoder_forward.1} parent=1 // pred_region
      %129 = dma.done [#allocation6], 16
    $region49: #{autoencoder_forward.1} parent=1 // pred_fallthru
      _
    // Predicated region
    $region50: #{autoencoder_forward.1} parent=1 // pred_check
      _
    $region51: #{autoencoder_forward.1} parent=1 // pred_check_branch
      %131 = sbr.rel (0) target = $region53
    $region52: #{autoencoder_forward.1} parent=1 // pred_region
      %132 = dma.done [#allocation9], 1024
    $region53: #{autoencoder_forward.1} parent=1 // pred_fallthru
      _
    // Predicated region
    $region54: #{autoencoder_forward.1} parent=1 // pred_check
      _
    $region55: #{autoencoder_forward.1} parent=1 // pred_check_branch
      %134 = sbr.rel (0) target = $region57
    $region56: #{autoencoder_forward.1} parent=1 // pred_region
      %135 = dma.done [#allocation9], 16
    $region57: #{autoencoder_forward.1} parent=1 // pred_fallthru
      _
    // Predicated region
    $region58: #{autoencoder_forward.1} parent=1 // pred_check
      _
    $region59: #{autoencoder_forward.1} parent=1 // pred_check_branch
      %137 = sbr.rel (0) target = $region61
    $region60: #{autoencoder_forward.1} parent=1 // pred_region
      %138 = dma.done [#allocation12], 1024
    $region61: #{autoencoder_forward.1} parent=1 // pred_fallthru
      _
    // Predicated region
    $region62: #{autoencoder_forward.1} parent=1 // pred_check
      _
    $region63: #{autoencoder_forward.1} parent=1 // pred_check_branch
      %140 = sbr.rel (0) target = $region65
    $region64: #{autoencoder_forward.1} parent=1 // pred_region
      %141 = dma.done [#allocation12], 16
    $region65: #{autoencoder_forward.1} parent=1 // pred_fallthru
      _
    // Predicated region
    $region66: #{autoencoder_forward.1} parent=1 // pred_check
      _
    $region67: #{autoencoder_forward.1} parent=1 // pred_check_branch
      %143 = sbr.rel (0) target = $region69
    $region68: #{autoencoder_forward.1} parent=1 // pred_region
      %144 = dma.done [#allocation15], 1024
    $region69: #{autoencoder_forward.1} parent=1 // pred_fallthru
      _
    // Predicated region
    $region70: #{autoencoder_forward.1} parent=1 // pred_check
      _
    $region71: #{autoencoder_forward.1} parent=1 // pred_check_branch
      %146 = sbr.rel (0) target = $region73
    $region72: #{autoencoder_forward.1} parent=1 // pred_region
      %147 = dma.done [#allocation15], 16
    $region73: #{autoencoder_forward.1} parent=1 // pred_fallthru
      _
    %v149 = vld [vmem:[#allocation2] sm:$0xf]
    %v150 = vld [vmem:[#allocation5] sm:$0xf]
    %v151 = vld [vmem:[#allocation5 + $0x4] sm:$0xf]
    %v152 = vld [vmem:[#allocation5 + $0x8] sm:$0xf]
    %v153 = vld [vmem:[#allocation5 + $0xc] sm:$0xf]
    %v154 = vld [vmem:[#allocation5 + $0x10] sm:$0xf]
    %v155 = vld [vmem:[#allocation5 + $0x14] sm:$0xf]
    %v156 = vld [vmem:[#allocation5 + $0x18] sm:$0xf]
    %v157 = vld [vmem:[#allocation5 + $0x1c] sm:$0xf]
    %v158 = vld [vmem:[#allocation5 + $0x20] sm:$0xf]
    %v159 = vld [vmem:[#allocation5 + $0x24] sm:$0xf]
    %v160 = vld [vmem:[#allocation5 + $0x28] sm:$0xf]
    %v161 = vld [vmem:[#allocation5 + $0x2c] sm:$0xf]
    %v162 = vld [vmem:[#allocation5 + $0x30] sm:$0xf]
    %v163 = vld [vmem:[#allocation5 + $0x34] sm:$0xf]
    %v164 = vld [vmem:[#allocation5 + $0x38] sm:$0xf]
    %v165 = vld [vmem:[#allocation5 + $0x3c] sm:$0xf]
    %v166 = vld [vmem:[#allocation7] sm:$0x1]
    %v168 = vlaneseq
    %v169 = vshrl.u32 %v168, 7
    %v170 = vsub.s32 0, %v169
    %v171 = vrot.slane %v166, %v170
    %v189 = vunpack.c.l.b16 %v150
    %v190 = vunpack.c.l.b16 %v151
    %v191 = vunpack.c.l.b16 %v152
    %v192 = vunpack.c.l.b16 %v153
    %v193 = vunpack.c.l.b16 %v154
    %v194 = vunpack.c.l.b16 %v155
    %v195 = vunpack.c.l.b16 %v156
    %v196 = vunpack.c.l.b16 %v157
    %v197 = vunpack.c.l.b16 %v158
    %v198 = vunpack.c.l.b16 %v159
    %v199 = vunpack.c.l.b16 %v160
    %v200 = vunpack.c.l.b16 %v161
    %v201 = vunpack.c.l.b16 %v162
    %v202 = vunpack.c.l.b16 %v163
    %v203 = vunpack.c.l.b16 %v164
    %v204 = vunpack.c.l.b16 %v165
    %v205 = vpack.c.b16 %v190, %v189
    %v206 = vpack.c.b16 %v192, %v191
    %v207 = vpack.c.b16 %v194, %v193
    %v208 = vpack.c.b16 %v196, %v195
    %v209 = vpack.c.b16 %v198, %v197
    %v210 = vpack.c.b16 %v200, %v199
    %v211 = vpack.c.b16 %v202, %v201
    %v212 = vpack.c.b16 %v204, %v203
    %221 = vmatprep.subr.bf16.mxu0 0
    %222 = vmatpush1.bf16.msra.mxu0 %v205
    %223 = vmatprep.subr.bf16.mxu0 0
    %224 = vmatpush1.bf16.msra.mxu0 %v206
    %225 = vmatprep.subr.bf16.mxu0 0
    %226 = vmatpush1.bf16.msra.mxu0 %v207
    %227 = vmatprep.subr.bf16.mxu0 0
    %228 = vmatpush1.bf16.msra.mxu0 %v208
    %229 = vmatprep.subr.bf16.mxu0 0
    %230 = vmatpush1.bf16.msra.mxu0 %v209
    %231 = vmatprep.subr.bf16.mxu0 0
    %232 = vmatpush1.bf16.msra.mxu0 %v210
    %233 = vmatprep.subr.bf16.mxu0 0
    %234 = vmatpush1.bf16.msra.mxu0 %v211
    %235 = vmatprep.subr.bf16.mxu0 0
    %236 = vmatpush1.bf16.msra.mxu0 %v212
    %237 = vmatprep.subr.bf16.mxu0 0
    %238 = vmatpush1.bf16.msra.mxu0 0
    %239 = vmatprep.subr.bf16.mxu0 0
    %240 = vmatpush1.bf16.msra.mxu0 0
    %241 = vmatprep.subr.bf16.mxu0 0
    %242 = vmatpush1.bf16.msra.mxu0 0
    %243 = vmatprep.subr.bf16.mxu0 0
    %244 = vmatpush1.bf16.msra.mxu0 0
    %245 = vmatprep.subr.bf16.mxu0 0
    %246 = vmatpush1.bf16.msra.mxu0 0
    %247 = vmatprep.subr.bf16.mxu0 0
    %248 = vmatpush1.bf16.msra.mxu0 0
    %249 = vmatprep.subr.bf16.mxu0 0
    %250 = vmatpush1.bf16.msra.mxu0 0
    %251 = vmatprep.subr.bf16.mxu0 0
    %252 = vmatpush1.bf16.msra.mxu0 0
    %253 = vmatprep.mubr.bf16.mxu0 0
    %254 = vmatmul.mubr.bf16.gmra.mrb[0].mxu0 %v149
    %v255 = vpop.f32.mrb[0].mxu0
    %v256 = vadd.f32 %v171, %v255
    %v257 = vpop.f32.mrb[0].mxu0
    %v258 = vpop.f32.mrb[0].mxu0
    %v259 = vpop.f32.mrb[0].mxu0
    %260 = vdwg.mxu0
    %v261 = vmax.f32 %v256, 0.0
    %v262 = vpack.c.bf16 %v261, %v261
    %v263 = vld [vmem:[#allocation8] sm:$0xf]
    %v264 = vld [vmem:[#allocation8 + $0x4] sm:$0xf]
    %v265 = vld [vmem:[#allocation8 + $0x8] sm:$0xf]
    %v266 = vld [vmem:[#allocation8 + $0xc] sm:$0xf]
    %v267 = vld [vmem:[#allocation8 + $0x10] sm:$0xf]
    %v268 = vld [vmem:[#allocation8 + $0x14] sm:$0xf]
    %v269 = vld [vmem:[#allocation8 + $0x18] sm:$0xf]
    %v270 = vld [vmem:[#allocation8 + $0x1c] sm:$0xf]
    %v271 = vld [vmem:[#allocation8 + $0x20] sm:$0xf]
    %v272 = vld [vmem:[#allocation8 + $0x24] sm:$0xf]
    %v273 = vld [vmem:[#allocation8 + $0x28] sm:$0xf]
    %v274 = vld [vmem:[#allocation8 + $0x2c] sm:$0xf]
    %v275 = vld [vmem:[#allocation8 + $0x30] sm:$0xf]
    %v276 = vld [vmem:[#allocation8 + $0x34] sm:$0xf]
    %v277 = vld [vmem:[#allocation8 + $0x38] sm:$0xf]
    %v278 = vld [vmem:[#allocation8 + $0x3c] sm:$0xf]
    %v279 = vld [vmem:[#allocation10] sm:$0x1]
    %v281 = vlaneseq
    %v282 = vshrl.u32 %v281, 7
    %v283 = vsub.s32 0, %v282
    %v284 = vrot.slane %v279, %v283
    %v302 = vunpack.c.l.b16 %v263
    %v303 = vunpack.c.l.b16 %v264
    %v304 = vunpack.c.l.b16 %v265
    %v305 = vunpack.c.l.b16 %v266
    %v306 = vunpack.c.l.b16 %v267
    %v307 = vunpack.c.l.b16 %v268
    %v308 = vunpack.c.l.b16 %v269
    %v309 = vunpack.c.l.b16 %v270
    %v310 = vunpack.c.l.b16 %v271
    %v311 = vunpack.c.l.b16 %v272
    %v312 = vunpack.c.l.b16 %v273
    %v313 = vunpack.c.l.b16 %v274
    %v314 = vunpack.c.l.b16 %v275
    %v315 = vunpack.c.l.b16 %v276
    %v316 = vunpack.c.l.b16 %v277
    %v317 = vunpack.c.l.b16 %v278
    %v318 = vpack.c.b16 %v303, %v302
    %v319 = vpack.c.b16 %v305, %v304
    %v320 = vpack.c.b16 %v307, %v306
    %v321 = vpack.c.b16 %v309, %v308
    %v322 = vpack.c.b16 %v311, %v310
    %v323 = vpack.c.b16 %v313, %v312
    %v324 = vpack.c.b16 %v315, %v314
    %v325 = vpack.c.b16 %v317, %v316
    %334 = vmatprep.subr.bf16.mxu0 0
    %335 = vmatpush1.bf16.msra.mxu0 %v318
    %336 = vmatprep.subr.bf16.mxu0 0
    %337 = vmatpush1.bf16.msra.mxu0 %v319
    %338 = vmatprep.subr.bf16.mxu0 0
    %339 = vmatpush1.bf16.msra.mxu0 %v320
    %340 = vmatprep.subr.bf16.mxu0 0
    %341 = vmatpush1.bf16.msra.mxu0 %v321
    %342 = vmatprep.subr.bf16.mxu0 0
    %343 = vmatpush1.bf16.msra.mxu0 %v322
    %344 = vmatprep.subr.bf16.mxu0 0
    %345 = vmatpush1.bf16.msra.mxu0 %v323
    %346 = vmatprep.subr.bf16.mxu0 0
    %347 = vmatpush1.bf16.msra.mxu0 %v324
    %348 = vmatprep.subr.bf16.mxu0 0
    %349 = vmatpush1.bf16.msra.mxu0 %v325
    %350 = vmatprep.subr.bf16.mxu0 0
    %351 = vmatpush1.bf16.msra.mxu0 0
    %352 = vmatprep.subr.bf16.mxu0 0
    %353 = vmatpush1.bf16.msra.mxu0 0
    %354 = vmatprep.subr.bf16.mxu0 0
    %355 = vmatpush1.bf16.msra.mxu0 0
    %356 = vmatprep.subr.bf16.mxu0 0
    %357 = vmatpush1.bf16.msra.mxu0 0
    %358 = vmatprep.subr.bf16.mxu0 0
    %359 = vmatpush1.bf16.msra.mxu0 0
    %360 = vmatprep.subr.bf16.mxu0 0
    %361 = vmatpush1.bf16.msra.mxu0 0
    %362 = vmatprep.subr.bf16.mxu0 0
    %363 = vmatpush1.bf16.msra.mxu0 0
    %364 = vmatprep.subr.bf16.mxu0 0
    %365 = vmatpush1.bf16.msra.mxu0 0
    %366 = vmatprep.mubr.bf16.mxu0 0
    %367 = vmatmul.mubr.bf16.gmra.mrb[0].mxu0 %v262
    %v368 = vpop.f32.mrb[0].mxu0
    %v369 = vadd.f32 %v284, %v368
    %v370 = vpop.f32.mrb[0].mxu0
    %v371 = vpop.f32.mrb[0].mxu0
    %v372 = vpop.f32.mrb[0].mxu0
    %373 = vdwg.mxu0
    %v374 = vmax.f32 %v369, 0.0
    %v375 = vpack.c.bf16 %v374, %v374
    %v376 = vld [vmem:[#allocation11] sm:$0xf]
    %v377 = vld [vmem:[#allocation11 + $0x4] sm:$0xf]
    %v378 = vld [vmem:[#allocation11 + $0x8] sm:$0xf]
    %v379 = vld [vmem:[#allocation11 + $0xc] sm:$0xf]
    %v380 = vld [vmem:[#allocation11 + $0x10] sm:$0xf]
    %v381 = vld [vmem:[#allocation11 + $0x14] sm:$0xf]
    %v382 = vld [vmem:[#allocation11 + $0x18] sm:$0xf]
    %v383 = vld [vmem:[#allocation11 + $0x1c] sm:$0xf]
    %v384 = vld [vmem:[#allocation11 + $0x20] sm:$0xf]
    %v385 = vld [vmem:[#allocation11 + $0x24] sm:$0xf]
    %v386 = vld [vmem:[#allocation11 + $0x28] sm:$0xf]
    %v387 = vld [vmem:[#allocation11 + $0x2c] sm:$0xf]
    %v388 = vld [vmem:[#allocation11 + $0x30] sm:$0xf]
    %v389 = vld [vmem:[#allocation11 + $0x34] sm:$0xf]
    %v390 = vld [vmem:[#allocation11 + $0x38] sm:$0xf]
    %v391 = vld [vmem:[#allocation11 + $0x3c] sm:$0xf]
    %v392 = vld [vmem:[#allocation13] sm:$0x1]
    %v394 = vlaneseq
    %v395 = vshrl.u32 %v394, 7
    %v396 = vsub.s32 0, %v395
    %v397 = vrot.slane %v392, %v396
    %v415 = vunpack.c.l.b16 %v376
    %v416 = vunpack.c.l.b16 %v377
    %v417 = vunpack.c.l.b16 %v378
    %v418 = vunpack.c.l.b16 %v379
    %v419 = vunpack.c.l.b16 %v380
    %v420 = vunpack.c.l.b16 %v381
    %v421 = vunpack.c.l.b16 %v382
    %v422 = vunpack.c.l.b16 %v383
    %v423 = vunpack.c.l.b16 %v384
    %v424 = vunpack.c.l.b16 %v385
    %v425 = vunpack.c.l.b16 %v386
    %v426 = vunpack.c.l.b16 %v387
    %v427 = vunpack.c.l.b16 %v388
    %v428 = vunpack.c.l.b16 %v389
    %v429 = vunpack.c.l.b16 %v390
    %v430 = vunpack.c.l.b16 %v391
    %v431 = vpack.c.b16 %v416, %v415
    %v432 = vpack.c.b16 %v418, %v417
    %v433 = vpack.c.b16 %v420, %v419
    %v434 = vpack.c.b16 %v422, %v421
    %v435 = vpack.c.b16 %v424, %v423
    %v436 = vpack.c.b16 %v426, %v425
    %v437 = vpack.c.b16 %v428, %v427
    %v438 = vpack.c.b16 %v430, %v429
    %447 = vmatprep.subr.bf16.mxu0 0
    %448 = vmatpush1.bf16.msra.mxu0 %v431
    %449 = vmatprep.subr.bf16.mxu0 0
    %450 = vmatpush1.bf16.msra.mxu0 %v432
    %451 = vmatprep.subr.bf16.mxu0 0
    %452 = vmatpush1.bf16.msra.mxu0 %v433
    %453 = vmatprep.subr.bf16.mxu0 0
    %454 = vmatpush1.bf16.msra.mxu0 %v434
    %455 = vmatprep.subr.bf16.mxu0 0
    %456 = vmatpush1.bf16.msra.mxu0 %v435
    %457 = vmatprep.subr.bf16.mxu0 0
    %458 = vmatpush1.bf16.msra.mxu0 %v436
    %459 = vmatprep.subr.bf16.mxu0 0
    %460 = vmatpush1.bf16.msra.mxu0 %v437
    %461 = vmatprep.subr.bf16.mxu0 0
    %462 = vmatpush1.bf16.msra.mxu0 %v438
    %463 = vmatprep.subr.bf16.mxu0 0
    %464 = vmatpush1.bf16.msra.mxu0 0
    %465 = vmatprep.subr.bf16.mxu0 0
    %466 = vmatpush1.bf16.msra.mxu0 0
    %467 = vmatprep.subr.bf16.mxu0 0
    %468 = vmatpush1.bf16.msra.mxu0 0
    %469 = vmatprep.subr.bf16.mxu0 0
    %470 = vmatpush1.bf16.msra.mxu0 0
    %471 = vmatprep.subr.bf16.mxu0 0
    %472 = vmatpush1.bf16.msra.mxu0 0
    %473 = vmatprep.subr.bf16.mxu0 0
    %474 = vmatpush1.bf16.msra.mxu0 0
    %475 = vmatprep.subr.bf16.mxu0 0
    %476 = vmatpush1.bf16.msra.mxu0 0
    %477 = vmatprep.subr.bf16.mxu0 0
    %478 = vmatpush1.bf16.msra.mxu0 0
    %479 = vmatprep.mubr.bf16.mxu0 0
    %480 = vmatmul.mubr.bf16.gmra.mrb[0].mxu0 %v375
    %v481 = vpop.f32.mrb[0].mxu0
    %v482 = vadd.f32 %v397, %v481
    %v483 = vpop.f32.mrb[0].mxu0
    %v484 = vpop.f32.mrb[0].mxu0
    %v485 = vpop.f32.mrb[0].mxu0
    %486 = vdwg.mxu0
    %v487 = vmax.f32 %v482, 0.0
    %v488 = vpack.c.bf16 %v487, %v487
    %v489 = vld [vmem:[#allocation14] sm:$0xf]
    %v490 = vld [vmem:[#allocation14 + $0x4] sm:$0xf]
    %v491 = vld [vmem:[#allocation14 + $0x8] sm:$0xf]
    %v492 = vld [vmem:[#allocation14 + $0xc] sm:$0xf]
    %v493 = vld [vmem:[#allocation14 + $0x10] sm:$0xf]
    %v494 = vld [vmem:[#allocation14 + $0x14] sm:$0xf]
    %v495 = vld [vmem:[#allocation14 + $0x18] sm:$0xf]
    %v496 = vld [vmem:[#allocation14 + $0x1c] sm:$0xf]
    %v497 = vld [vmem:[#allocation14 + $0x20] sm:$0xf]
    %v498 = vld [vmem:[#allocation14 + $0x24] sm:$0xf]
    %v499 = vld [vmem:[#allocation14 + $0x28] sm:$0xf]
    %v500 = vld [vmem:[#allocation14 + $0x2c] sm:$0xf]
    %v501 = vld [vmem:[#allocation14 + $0x30] sm:$0xf]
    %v502 = vld [vmem:[#allocation14 + $0x34] sm:$0xf]
    %v503 = vld [vmem:[#allocation14 + $0x38] sm:$0xf]
    %v504 = vld [vmem:[#allocation14 + $0x3c] sm:$0xf]
    %v505 = vld [vmem:[#allocation16] sm:$0x1]
    %v507 = vlaneseq
    %v508 = vshrl.u32 %v507, 7
    %v509 = vsub.s32 0, %v508
    %v510 = vrot.slane %v505, %v509
    %v528 = vunpack.c.l.b16 %v489
    %v529 = vunpack.c.l.b16 %v490
    %v530 = vunpack.c.l.b16 %v491
    %v531 = vunpack.c.l.b16 %v492
    %v532 = vunpack.c.l.b16 %v493
    %v533 = vunpack.c.l.b16 %v494
    %v534 = vunpack.c.l.b16 %v495
    %v535 = vunpack.c.l.b16 %v496
    %v536 = vunpack.c.l.b16 %v497
    %v537 = vunpack.c.l.b16 %v498
    %v538 = vunpack.c.l.b16 %v499
    %v539 = vunpack.c.l.b16 %v500
    %v540 = vunpack.c.l.b16 %v501
    %v541 = vunpack.c.l.b16 %v502
    %v542 = vunpack.c.l.b16 %v503
    %v543 = vunpack.c.l.b16 %v504
    %v544 = vpack.c.b16 %v529, %v528
    %v545 = vpack.c.b16 %v531, %v530
    %v546 = vpack.c.b16 %v533, %v532
    %v547 = vpack.c.b16 %v535, %v534
    %v548 = vpack.c.b16 %v537, %v536
    %v549 = vpack.c.b16 %v539, %v538
    %v550 = vpack.c.b16 %v541, %v540
    %v551 = vpack.c.b16 %v543, %v542
    %560 = vmatprep.subr.bf16.mxu0 0
    %561 = vmatpush1.bf16.msra.mxu0 %v544
    %562 = vmatprep.subr.bf16.mxu0 0
    %563 = vmatpush1.bf16.msra.mxu0 %v545
    %564 = vmatprep.subr.bf16.mxu0 0
    %565 = vmatpush1.bf16.msra.mxu0 %v546
    %566 = vmatprep.subr.bf16.mxu0 0
    %567 = vmatpush1.bf16.msra.mxu0 %v547
    %568 = vmatprep.subr.bf16.mxu0 0
    %569 = vmatpush1.bf16.msra.mxu0 %v548
    %570 = vmatprep.subr.bf16.mxu0 0
    %571 = vmatpush1.bf16.msra.mxu0 %v549
    %572 = vmatprep.subr.bf16.mxu0 0
    %573 = vmatpush1.bf16.msra.mxu0 %v550
    %574 = vmatprep.subr.bf16.mxu0 0
    %575 = vmatpush1.bf16.msra.mxu0 %v551
    %576 = vmatprep.subr.bf16.mxu0 0
    %577 = vmatpush1.bf16.msra.mxu0 0
    %578 = vmatprep.subr.bf16.mxu0 0
    %579 = vmatpush1.bf16.msra.mxu0 0
    %580 = vmatprep.subr.bf16.mxu0 0
    %581 = vmatpush1.bf16.msra.mxu0 0
    %582 = vmatprep.subr.bf16.mxu0 0
    %583 = vmatpush1.bf16.msra.mxu0 0
    %584 = vmatprep.subr.bf16.mxu0 0
    %585 = vmatpush1.bf16.msra.mxu0 0
    %586 = vmatprep.subr.bf16.mxu0 0
    %587 = vmatpush1.bf16.msra.mxu0 0
    %588 = vmatprep.subr.bf16.mxu0 0
    %589 = vmatpush1.bf16.msra.mxu0 0
    %590 = vmatprep.subr.bf16.mxu0 0
    %591 = vmatpush1.bf16.msra.mxu0 0
    %592 = vmatprep.mubr.bf16.mxu0 0
    %593 = vmatmul.mubr.bf16.gmra.mrb[0].mxu0 %v488
    %v594 = vpop.f32.mrb[0].mxu0
    %v595 = vadd.f32 %v510, %v594
    %v596 = vpop.f32.mrb[0].mxu0
    %v597 = vpop.f32.mrb[0].mxu0
    %v598 = vpop.f32.mrb[0].mxu0
    %599 = vdwg.mxu0
    %600 = vst [vmem:[#allocation17] sm:$0xff] %v374
    %601 = vst [vmem:[#allocation18] sm:$0xff] %v595
    // Predicated region
    $region74: #{autoencoder_forward.1} parent=1 // pred_check
      _
    $region75: #{autoencoder_forward.1} parent=1 // pred_check_branch
      %603 = sbr.rel (0) target = $region77
    $region76: #{autoencoder_forward.1} parent=1 // pred_region
      %s605 = ssub.s32 128, 128
      %606 = vsyncadd [#allocation4], %s605
      %s608 = sshll.u32 [#allocation17], 4
      %s609 = int_to_ptr.vmem [resolvable:$true] %s608
      %611 = dma.vmem_to_hbm [thread:$0]  %s609, 128, %s9, [#allocation4]
    $region77: #{autoencoder_forward.1} parent=1 // pred_fallthru
      _
    // Predicated region
    $region78: #{autoencoder_forward.1} parent=1 // pred_check
      _
    $region79: #{autoencoder_forward.1} parent=1 // pred_check_branch
      %613 = sbr.rel (0) target = $region81
    $region80: #{autoencoder_forward.1} parent=1 // pred_region
      %s615 = ssub.s32 128, 128
      %616 = vsyncadd [#allocation19], %s615
      %s618 = sshll.u32 [#allocation18], 4
      %s619 = int_to_ptr.vmem [resolvable:$true] %s618
      %621 = dma.vmem_to_hbm [thread:$0]  %s619, 128, %s10, [#allocation19]
    $region81: #{autoencoder_forward.1} parent=1 // pred_fallthru
      _
    // Predicated region
    $region82: #{autoencoder_forward.1} parent=1 // pred_check
      _
    $region83: #{autoencoder_forward.1} parent=1 // pred_check_branch
      %623 = sbr.rel (0) target = $region85
    $region84: #{autoencoder_forward.1} parent=1 // pred_region
      %624 = dma.done [#allocation4], 128
    $region85: #{autoencoder_forward.1} parent=1 // pred_fallthru
      _
    // Predicated region
    $region86: #{autoencoder_forward.1} parent=1 // pred_check
      _
    $region87: #{autoencoder_forward.1} parent=1 // pred_check_branch
      %626 = sbr.rel (0) target = $region89
    $region88: #{autoencoder_forward.1} parent=1 // pred_region
      %627 = dma.done [#allocation19], 128
    $region89: #{autoencoder_forward.1} parent=1 // pred_fallthru
      _
    %628 = vsyncpa [#allocation3], 1
    %629 = vsyncpa [#allocation6], 1
    %630 = vsyncpa [#allocation9], 1
    %631 = vsyncpa [#allocation12], 1
    %632 = vsyncpa [#allocation15], 1
    %633 = vsyncpa [#allocation4], 1
    %634 = vsyncpa [#allocation19], 1

</llo_original>
